<compile_context>
chip_gen: v6e
topology: v6e:2x2x1
jax: 0.10.0
libtpu: 0.0.40
codegen_flags: <defaults>
</compile_context>

<pallas_src>
import math

import jax
import jax.numpy as jnp
from jax.experimental import pallas as pl
from jax.experimental.pallas import tpu as pltpu

# Model constants (from TheModelClass.__init__).
C_IN, C_OUT, KH, KW = 1, 4, 3, 3        # conv1 = Conv2d(1, 4, 3, stride=1)
FC_IN, FC_OUT = 4, 2                    # fc1   = Linear(4, 2)
W_IN = FC_IN + KW - 1                   # 6: required input width
WO = W_IN - (KW - 1)                    # 4: conv output width == FC_IN
F1 = C_OUT * WO                         # 16: conv features per output row
F2 = C_OUT * FC_OUT                     # 8 : final features per output row
TM_TARGET = 16 * 1024                   # lane-tile target over M = N*H


def _fused_kernel(x_ref, w2_ref, b2_ref, w3_ref, b3_ref, o_ref):
    """relu(W3 @ relu(sum_kh W2[kh] @ shift_kh(x) + b2) + b3), lane-dense over M.

    x_ref : (6, TM)    raw input columns; column m = x[n, i, :] with m = n*H + i
    w2_ref: (3, 16, 6) one conv tap matrix per kernel row kh (VMEM-resident)
    o_ref : (8, TM)    output columns; per-image columns with i >= H-2 are
                       conv-halo garbage and are dropped by the wrapper.
    """
    x0 = x_ref[...]                                          # (6, TM)
    # In-VMEM im2row: tap kh needs column m + kh.  Wrapped values only ever
    # land in columns the wrapper discards (tiles contain whole images).
    x1 = jnp.concatenate([x0[:, 1:], x0[:, :1]], axis=1)     # col m -> m + 1
    x2 = jnp.concatenate([x0[:, 2:], x0[:, :2]], axis=1)     # col m -> m + 2

    h = jnp.dot(w2_ref[0], x0, preferred_element_type=jnp.float32)
    h = h + jnp.dot(w2_ref[1], x1, preferred_element_type=jnp.float32)
    h = h + jnp.dot(w2_ref[2], x2, preferred_element_type=jnp.float32)
    h = jnp.maximum(h + b2_ref[...], 0.0)                    # (16, TM)  conv+ReLU

    y = jnp.dot(w3_ref[...], h, preferred_element_type=jnp.float32)
    o_ref[...] = jnp.maximum(y + b3_ref[...], 0.0)           # (8, TM)   fc+ReLU


def pack_params(wc, bc, wf, bf):
    """One-time packing of the PyTorch params into matmul form (pure jnp)."""
    wc = wc.astype(jnp.float32)      # (4, 1, 3, 3)
    bc = bc.astype(jnp.float32)      # (4,)
    wf = wf.astype(jnp.float32)      # (2, 4)
    bf = bf.astype(jnp.float32)      # (2,)

    # Conv row kh as a matmul tap: w2[kh, c*WO + j, w] = wc[c, 0, kh, w - j].
    j = jnp.arange(WO)[:, None, None]
    kw = jnp.arange(KW)[None, :, None]
    w = jnp.arange(W_IN)[None, None, :]
    sel = (w == j + kw).astype(jnp.float32)                  # (WO, KW, W_IN)
    w2 = jnp.einsum("chk,jkw->hcjw", wc[:, 0], sel)          # (KH, C_OUT, WO, W_IN)
    w2 = w2.reshape(KH, F1, W_IN)
    b2 = jnp.repeat(bc, WO)[:, None]                         # (F1, 1)

    # fc1 applied per conv channel on the width axis -> block-diagonal:
    # w3[c*FC_OUT + o, c*WO + j] = wf[o, j].
    w3 = jnp.einsum("cd,oj->codj", jnp.eye(C_OUT, dtype=jnp.float32), wf)
    w3 = w3.reshape(F2, F1)
    b3 = jnp.tile(bf, C_OUT)[:, None]                        # (F2, 1)
    return w2, b2, w3, b3


def _choose_tm(m_total: int, h: int) -> int:
    """Lane tile over M = N*H.

    Tiles must be a multiple of 128 (lane alignment) and of H (whole images
    per tile so the +1/+2 column shifts never leak valid data across a tile
    boundary).  Aim for ~TM_TARGET lanes/step to amortize the ~0.35us
    per-grid-step overhead, but keep >=2 blocks when possible so the
    "parallel" axis can use both of v7x's TensorCores.
    """
    if m_total <= TM_TARGET:
        return m_total                          # single block (full extent is legal)
    unit = h * 128 // math.gcd(h, 128)          # lcm(H, 128)
    units_total = -(-m_total // unit)
    units_per_tile = max(1, min(TM_TARGET // unit, -(-units_total // 2)))
    tm = units_per_tile * unit
    return m_total if tm >= m_total else tm


@jax.jit
def the_model_forward(x, w2, b2, w3, b3):
    """x: (N, 1, H, 6) f32; returns (N, 4, H-2, 2) f32 (PyTorch NCHW output)."""
    N, cin, H, W = x.shape
    if cin != C_IN or W != W_IN:
        raise ValueError(
            "TheModelClass.forward only type-checks for inputs of shape "
            f"(N, 1, H, {W_IN}) (conv output width must equal fc1.in_features=4); "
            f"got {x.shape}")
    if H < KH:
        raise ValueError(f"H must be >= {KH}; got H={H}")
    Ho = H - (KH - 1)
    M = N * H

    # Lay x out lane-dense as (6, N*H): the only pre-kernel copy of the input
    # (one cheap pass over raw x).  im2row itself happens inside the kernel.
    xt = jnp.transpose(x[:, 0, :, :], (2, 0, 1)).reshape(W_IN, M)

    TM = _choose_tm(M, H)
    grid = (-(-M // TM),)

    out = pl.pallas_call(
        _fused_kernel,
        out_shape=jax.ShapeDtypeStruct((F2, M), jnp.float32),
        grid=grid,
        in_specs=[
            pl.BlockSpec((W_IN, TM), lambda i: (0, i)),         # activations, tiled over M
            pl.BlockSpec((KH, F1, W_IN), lambda i: (0, 0, 0)),  # weights stay resident
            pl.BlockSpec((F1, 1), lambda i: (0, 0)),
            pl.BlockSpec((F2, F1), lambda i: (0, 0)),
            pl.BlockSpec((F2, 1), lambda i: (0, 0)),
        ],
        out_specs=pl.BlockSpec((F2, TM), lambda i: (0, i)),
        compiler_params=pltpu.CompilerParams(
            dimension_semantics=("parallel",),
            vmem_limit_bytes=32 * 1024 * 1024,   # v5e default scoped VMEM is only 16 MiB
        ),
    )(xt, w2, b2, w3, b3)

    # (F2, N*H) -> (N, C_OUT, Ho, FC_OUT): drop per-image conv-halo columns and
    # permute to NCHW.  Slice + transposes fuse into a single XLA copy.
    y = out.reshape(C_OUT, FC_OUT, N, H)[:, :, :, :Ho].transpose(2, 0, 3, 1)
    return y


def reference_forward(x, wc, bc, wf, bf):
    """Pure-JAX reference matching PyTorch semantics."""
    conv = jax.lax.conv_general_dilated(
        x, wc, window_strides=(1, 1), padding="VALID",
        dimension_numbers=("NCHW", "OIHW", "NCHW"))
    h = jnp.maximum(conv + bc[None, :, None, None], 0.0)
    y = jnp.einsum("nchw,ow->ncho", h, wf) + bf[None, None, None, :]
    return jnp.maximum(y, 0.0)


if __name__ == "__main__":
    key = jax.random.PRNGKey(0)
    kx, kwc, kbc, kwf, kbf = jax.random.split(key, 5)

    # Small shapes consistent with the module: N=2, C_in=1, H=16, W=6.
    N, H, W = 2, 16, W_IN
    x = jax.random.normal(kx, (N, C_IN, H, W), jnp.float32)

    # Deterministic synthetic parameter init (shapes from __init__).
    wc = jax.random.normal(kwc, (C_OUT, C_IN, KH, KW), jnp.float32) * 0.3
    bc = jax.random.normal(kbc, (C_OUT,), jnp.float32) * 0.1
    wf = jax.random.normal(kwf, (FC_OUT, FC_IN), jnp.float32) * 0.3
    bf = jax.random.normal(kbf, (FC_OUT,), jnp.float32) * 0.1

    packed = pack_params(wc, bc, wf, bf)      # once at init, off the hot path
    y = jax.block_until_ready(the_model_forward(x, *packed))
    y_ref = reference_forward(x, wc, bc, wf, bf)

    assert y.shape == (N, C_OUT, H - 2, FC_OUT), y.shape
    assert jnp.allclose(y, y_ref, atol=1e-5, rtol=1e-5), float(
        jnp.max(jnp.abs(y - y_ref)))

    print("KERNEL_OK")
</pallas_src>

<mosaic_0001>
module attributes {stable_mosaic.version = 11 : i64} {
  func.func @_fused_kernel(%arg0: i32, %arg1: memref<6x32xf32, #tpu.memory_space<vmem>>, %arg2: memref<3x16x6xf32, #tpu.memory_space<vmem>>, %arg3: memref<16x1xf32, #tpu.memory_space<vmem>>, %arg4: memref<8x16xf32, #tpu.memory_space<vmem>>, %arg5: memref<8x1xf32, #tpu.memory_space<vmem>>, %arg6: memref<8x32xf32, #tpu.memory_space<vmem>>) attributes {dimension_semantics = [#tpu.dimension_semantics<parallel>], iteration_bounds = array<i64: 1>, scalar_prefetch = 0 : i64, scratch_operands = 0 : i64, tpu.core_type = #tpu.core_type<tc>, window_params = [{transform_indices = @transform_0, window_bounds = array<i64: 6, 32>}, {pipeline_mode = #tpu.pipeline_mode<synchronous>, transform_indices = @transform_1, window_bounds = array<i64: 3, 16, 6>}, {pipeline_mode = #tpu.pipeline_mode<synchronous>, transform_indices = @transform_2, window_bounds = array<i64: 16, 1>}, {pipeline_mode = #tpu.pipeline_mode<synchronous>, transform_indices = @transform_3, window_bounds = array<i64: 8, 16>}, {pipeline_mode = #tpu.pipeline_mode<synchronous>, transform_indices = @transform_4, window_bounds = array<i64: 8, 1>}, {transform_indices = @transform_5, window_bounds = array<i64: 8, 32>}]} {
    %c0 = arith.constant 0 : index
    %c0_0 = arith.constant 0 : index
    %0 = vector.load %arg1[%c0, %c0_0] : memref<6x32xf32, #tpu.memory_space<vmem>>, vector<6x32xf32>
    %1 = vector.extract_strided_slice %0 {offsets = [0, 1], sizes = [6, 31], strides = [1, 1]} : vector<6x32xf32> to vector<6x31xf32>
    %2 = vector.extract_strided_slice %0 {offsets = [0, 0], sizes = [6, 1], strides = [1, 1]} : vector<6x32xf32> to vector<6x1xf32>
    %3 = tpu.concatenate %1, %2 in 1 : vector<6x31xf32>, vector<6x1xf32> -> vector<6x32xf32>
    %4 = vector.extract_strided_slice %0 {offsets = [0, 2], sizes = [6, 30], strides = [1, 1]} : vector<6x32xf32> to vector<6x30xf32>
    %5 = vector.extract_strided_slice %0 {offsets = [0, 0], sizes = [6, 2], strides = [1, 1]} : vector<6x32xf32> to vector<6x2xf32>
    %6 = tpu.concatenate %4, %5 in 1 : vector<6x30xf32>, vector<6x2xf32> -> vector<6x32xf32>
    %c0_1 = arith.constant 0 : index
    %c0_2 = arith.constant 0 : index
    %c0_3 = arith.constant 0 : index
    %7 = vector.load %arg2[%c0_1, %c0_2, %c0_3] : memref<3x16x6xf32, #tpu.memory_space<vmem>>, vector<1x16x6xf32>
    %8 = vector.shape_cast %7 : vector<1x16x6xf32> to vector<16x6xf32>
    %cst = arith.constant dense<0.000000e+00> : vector<16x32xf32>
    %9 = tpu.matmul %8, %0, %cst {dimension_numbers = #tpu.dot_dimension_numbers<[1], [0], [0], [1], [0, 0, 1, 1], [], []>} : vector<16x6xf32>, vector<6x32xf32>, vector<16x32xf32> -> vector<16x32xf32>
    %c1 = arith.constant 1 : index
    %c0_4 = arith.constant 0 : index
    %c0_5 = arith.constant 0 : index
    %10 = vector.load %arg2[%c1, %c0_4, %c0_5] : memref<3x16x6xf32, #tpu.memory_space<vmem>>, vector<1x16x6xf32>
    %11 = vector.shape_cast %10 : vector<1x16x6xf32> to vector<16x6xf32>
    %cst_6 = arith.constant dense<0.000000e+00> : vector<16x32xf32>
    %12 = tpu.matmul %11, %3, %cst_6 {dimension_numbers = #tpu.dot_dimension_numbers<[1], [0], [0], [1], [0, 0, 1, 1], [], []>} : vector<16x6xf32>, vector<6x32xf32>, vector<16x32xf32> -> vector<16x32xf32>
    %13 = arith.addf %9, %12 : vector<16x32xf32>
    %c2 = arith.constant 2 : index
    %c0_7 = arith.constant 0 : index
    %c0_8 = arith.constant 0 : index
    %14 = vector.load %arg2[%c2, %c0_7, %c0_8] : memref<3x16x6xf32, #tpu.memory_space<vmem>>, vector<1x16x6xf32>
    %15 = vector.shape_cast %14 : vector<1x16x6xf32> to vector<16x6xf32>
    %cst_9 = arith.constant dense<0.000000e+00> : vector<16x32xf32>
    %16 = tpu.matmul %15, %6, %cst_9 {dimension_numbers = #tpu.dot_dimension_numbers<[1], [0], [0], [1], [0, 0, 1, 1], [], []>} : vector<16x6xf32>, vector<6x32xf32>, vector<16x32xf32> -> vector<16x32xf32>
    %17 = arith.addf %13, %16 : vector<16x32xf32>
    %c0_10 = arith.constant 0 : index
    %c0_11 = arith.constant 0 : index
    %18 = vector.load %arg3[%c0_10, %c0_11] : memref<16x1xf32, #tpu.memory_space<vmem>>, vector<16x1xf32>
    %19 = vector.broadcast %18 : vector<16x1xf32> to vector<16x32xf32>
    %20 = arith.addf %17, %19 : vector<16x32xf32>
    %cst_12 = arith.constant 0.000000e+00 : f32
    %21 = vector.broadcast %cst_12 : f32 to vector<16x32xf32>
    %22 = arith.maximumf %20, %21 : vector<16x32xf32>
    %c0_13 = arith.constant 0 : index
    %c0_14 = arith.constant 0 : index
    %23 = vector.load %arg4[%c0_13, %c0_14] : memref<8x16xf32, #tpu.memory_space<vmem>>, vector<8x16xf32>
    %cst_15 = arith.constant dense<0.000000e+00> : vector<8x32xf32>
    %24 = tpu.matmul %23, %22, %cst_15 {dimension_numbers = #tpu.dot_dimension_numbers<[1], [0], [0], [1], [0, 0, 1, 1], [], []>} : vector<8x16xf32>, vector<16x32xf32>, vector<8x32xf32> -> vector<8x32xf32>
    %c0_16 = arith.constant 0 : index
    %c0_17 = arith.constant 0 : index
    %25 = vector.load %arg5[%c0_16, %c0_17] : memref<8x1xf32, #tpu.memory_space<vmem>>, vector<8x1xf32>
    %26 = vector.broadcast %25 : vector<8x1xf32> to vector<8x32xf32>
    %27 = arith.addf %24, %26 : vector<8x32xf32>
    %cst_18 = arith.constant 0.000000e+00 : f32
    %28 = vector.broadcast %cst_18 : f32 to vector<8x32xf32>
    %29 = arith.maximumf %27, %28 : vector<8x32xf32>
    %c0_19 = arith.constant 0 : index
    %c0_20 = arith.constant 0 : index
    %30 = vector.load %arg6[%c0_19, %c0_20] : memref<8x32xf32, #tpu.memory_space<vmem>>, vector<8x32xf32>
    tpu.vector_store %arg6[%c0_19, %c0_20], %29 {strides = array<i32>} : memref<8x32xf32, #tpu.memory_space<vmem>>, vector<8x32xf32>,
    return
  }
  func.func @transform_0(%arg0: i32) -> (i32, i32) {
    %c0_i32 = arith.constant 0 : i32
    %c0_i32_0 = arith.constant 0 : i32
    return %c0_i32, %arg0 : i32, i32
  }
  func.func @transform_1(%arg0: i32) -> (i32, i32, i32) {
    %c0_i32 = arith.constant 0 : i32
    %c0_i32_0 = arith.constant 0 : i32
    %c0_i32_1 = arith.constant 0 : i32
    %c0_i32_2 = arith.constant 0 : i32
    return %c0_i32, %c0_i32_0, %c0_i32_1 : i32, i32, i32
  }
  func.func @transform_2(%arg0: i32) -> (i32, i32) {
    %c0_i32 = arith.constant 0 : i32
    %c0_i32_0 = arith.constant 0 : i32
    %c0_i32_1 = arith.constant 0 : i32
    return %c0_i32, %c0_i32_0 : i32, i32
  }
  func.func @transform_3(%arg0: i32) -> (i32, i32) {
    %c0_i32 = arith.constant 0 : i32
    %c0_i32_0 = arith.constant 0 : i32
    %c0_i32_1 = arith.constant 0 : i32
    return %c0_i32, %c0_i32_0 : i32, i32
  }
  func.func @transform_4(%arg0: i32) -> (i32, i32) {
    %c0_i32 = arith.constant 0 : i32
    %c0_i32_0 = arith.constant 0 : i32
    %c0_i32_1 = arith.constant 0 : i32
    return %c0_i32, %c0_i32_0 : i32, i32
  }
  func.func @transform_5(%arg0: i32) -> (i32, i32) {
    %c0_i32 = arith.constant 0 : i32
    %c0_i32_0 = arith.constant 0 : i32
    return %c0_i32, %arg0 : i32, i32
  }
}

</mosaic_0001>

<llo_original>
// kernel: the_model_forward.1
$region0: #{the_model_forward.1}
  #allocation0 [shape = 'u32[]', space=smem, size = 0x4, offset = 0x4, fixed_abs, tag = 'smem constant byte address 0x4 - core index']
  #allocation1 [shape = 'u32[144,128]{1,0:T(1,128)}', space=vmem, size = 0x12000, scoped, tag = 'internal scratch']
  %s0 = inlined_call_operand.vmem [shape: f32[6,32], index: 0, kind: input, shape index: {}]
  %s1 = inlined_call_operand.vmem [shape: f32[3,16,6], index: 1, kind: input, shape index: {}]
  %s2 = inlined_call_operand.vmem [shape: f32[16,1], index: 2, kind: input, shape index: {}]
  %s3 = inlined_call_operand.vmem [shape: f32[8,16], index: 3, kind: input, shape index: {}]
  %s4 = inlined_call_operand.vmem [shape: f32[8,1], index: 4, kind: input, shape index: {}]
  %s5 = inlined_call_operand.vmem [shape: f32[8,32], index: 5, kind: output, shape index: {}]
  %s6 = sld [smem:[#allocation0]]
  $region30: #{the_model_forward.1} parent=0
    _
  %s8 = ssub.s32 1, %s6
  %s9 = scalar_select 0, %s8, %s6
  // Predicated region
  $region2: #{the_model_forward.1} parent=0 // pred_check
    _
  $region3: #{the_model_forward.1} parent=0 // pred_check_branch
    %11 = sbr.rel (0) target = $region5
  $region4: #{the_model_forward.1} parent=0 // pred_region
    _
  $region5: #{the_model_forward.1} parent=0 // pred_fallthru
    _
  // Predicated region
  $region6: #{the_model_forward.1} parent=0 // pred_check
    _
  $region7: #{the_model_forward.1} parent=0 // pred_check_branch
    %13 = sbr.rel (0) target = $region9
  $region8: #{the_model_forward.1} parent=0 // pred_region
    _
  $region9: #{the_model_forward.1} parent=0 // pred_fallthru
    _
  // Predicated region
  $region10: #{the_model_forward.1} parent=0 // pred_check
    _
  $region11: #{the_model_forward.1} parent=0 // pred_check_branch
    %15 = sbr.rel (0) target = $region13
  $region12: #{the_model_forward.1} parent=0 // pred_region
    _
  $region13: #{the_model_forward.1} parent=0 // pred_fallthru
    _
  // Predicated region
  $region14: #{the_model_forward.1} parent=0 // pred_check
    _
  $region15: #{the_model_forward.1} parent=0 // pred_check_branch
    %17 = sbr.rel (0) target = $region17
  $region16: #{the_model_forward.1} parent=0 // pred_region
    _
  $region17: #{the_model_forward.1} parent=0 // pred_fallthru
    _
  // Predicated region
  $region18: #{the_model_forward.1} parent=0 // pred_check
    _
  $region19: #{the_model_forward.1} parent=0 // pred_check_branch
    %19 = sbr.rel (0) target = $region21
  $region20: #{the_model_forward.1} parent=0 // pred_region
    _
  $region21: #{the_model_forward.1} parent=0 // pred_fallthru
    _
  %v20 = vld [vmem:[%s0] sm:$0x3f]
  %22 = vrot.lane.b32.xlu0 %v20, 127
  %v23 = vpop.permute.xlu0 %22
  %25 = vrot.lane.b32.xlu0 %v20, 31
  %v26 = vpop.permute.xlu0 %25
  %vm28 = vcmask 252928
  %v29 = vsel %vm28, %v23, %v26
  %30 = vrot.lane.b32.xlu0 %v20, 126
  %v31 = vpop.permute.xlu0 %30
  %33 = vrot.lane.b32.xlu0 %v20, 30
  %v34 = vpop.permute.xlu0 %33
  %vm36 = vcmask 244736
  %v37 = vsel %vm36, %v31, %v34
  %v38 = vld [vmem:[%s1] sm:$0xff]
  %v39 = vld [vmem:[%s1 + $0x8] sm:$0xff]
  %s40 = scalar_lea.vmem %s1, 16
  %v41 = vld [vmem:[%s40] sm:$0xff]
  %v42 = vld [vmem:[%s40 + $0x8] sm:$0xff]
  %vm43 = vcmask 48128
  %v45 = vsel %vm43, %v41, 0
  %v48 = vsel %vm43, %v42, 0
  %vm50 = vcmask 1045504
  %v52 = vsel %vm50, %v29, 0
  %54 = vmatprep.subr.mxu0 0.0
  %55 = vmatpush1.msra.mxu0 0.0
  %56 = vmatprep.subr.mxu0 0.0
  %57 = vmatpush1.msra.mxu0 0.0
  %58 = vmatprep.subr.mxu0 0.0
  %59 = vmatpush1.msra.mxu0 0.0
  %60 = vmatprep.subr.mxu0 0.0
  %61 = vmatpush1.msra.mxu0 0.0
  %62 = vmatprep.subr.mxu0 0.0
  %63 = vmatpush1.msra.mxu0 0.0
  %64 = vmatprep.subr.mxu0 0.0
  %65 = vmatpush1.msra.mxu0 0.0
  %66 = vmatprep.subr.mxu0 0.0
  %67 = vmatpush1.msra.mxu0 0.0
  %68 = vmatprep.subr.mxu0 0.0
  %69 = vmatpush1.msra.mxu0 0.0
  %70 = vmatprep.subr.mxu0 0.0
  %71 = vmatpush1.msra.mxu0 0.0
  %72 = vmatprep.subr.mxu0 0.0
  %73 = vmatpush1.msra.mxu0 0.0
  %74 = vmatprep.subr.mxu0 0.0
  %75 = vmatpush1.msra.mxu0 0.0
  %76 = vmatprep.subr.mxu0 0.0
  %77 = vmatpush1.msra.mxu0 0.0
  %78 = vmatprep.subr.mxu0 0.0
  %79 = vmatpush1.msra.mxu0 0.0
  %80 = vmatprep.subr.mxu0 0.0
  %81 = vmatpush1.msra.mxu0 0.0
  %82 = vmatprep.subr.mxu0 0.0
  %83 = vmatpush1.msra.mxu0 0.0
  %84 = vmatprep.subr.mxu0 0.0
  %85 = vmatpush1.msra.mxu0 %v52
  %86 = vmatprep.subr.mxu0 0.0
  %87 = vmatpush2.msra.mxu0 0.0
  %88 = vmatprep.subr.mxu0 0.0
  %89 = vmatpush2.msra.mxu0 0.0
  %90 = vmatprep.subr.mxu0 0.0
  %91 = vmatpush2.msra.mxu0 0.0
  %92 = vmatprep.subr.mxu0 0.0
  %93 = vmatpush2.msra.mxu0 0.0
  %94 = vmatprep.subr.mxu0 0.0
  %95 = vmatpush2.msra.mxu0 0.0
  %96 = vmatprep.subr.mxu0 0.0
  %97 = vmatpush2.msra.mxu0 0.0
  %98 = vmatprep.subr.mxu0 0.0
  %99 = vmatpush2.msra.mxu0 0.0
  %100 = vmatprep.subr.mxu0 0.0
  %101 = vmatpush2.msra.mxu0 0.0
  %102 = vmatprep.subr.mxu0 0.0
  %103 = vmatpush2.msra.mxu0 0.0
  %104 = vmatprep.subr.mxu0 0.0
  %105 = vmatpush2.msra.mxu0 0.0
  %106 = vmatprep.subr.mxu0 0.0
  %107 = vmatpush2.msra.mxu0 0.0
  %108 = vmatprep.subr.mxu0 0.0
  %109 = vmatpush2.msra.mxu0 0.0
  %110 = vmatprep.subr.mxu0 0.0
  %111 = vmatpush2.msra.mxu0 0.0
  %112 = vmatprep.subr.mxu0 0.0
  %113 = vmatpush2.msra.mxu0 0.0
  %114 = vmatprep.subr.mxu0 0.0
  %115 = vmatpush2.msra.mxu0 0.0
  %116 = vmatprep.subr.mxu0 0.0
  %117 = vmatpush2.msra.mxu0 0.0
  %118 = vmatprep.mubr.f32.mxu0 0.0
  %119 = vmatmul.mubr.f32.gmra.mxu0 %v45
  %v120 = vpop.f32.mrf.mxu0
  %v121 = vadd.f32 0.0, %v120
  %v122 = vpop.f32.mrf.mxu0
  %123 = vmatprep.mubr.f32.mxu0 0.0
  %124 = vmatmul.mubr.f32.gmra.mxu0 %v48
  %v125 = vpop.f32.mrf.mxu0
  %v126 = vadd.f32 0.0, %v125
  %v127 = vpop.f32.mrf.mxu0
  %128 = vdwg.mxu0
  %v130 = vsel %vm43, %v38, 0
  %v133 = vsel %vm43, %v39, 0
  %v135 = vsel %vm50, %v20, 0
  %137 = vmatprep.subr.mxu0 0.0
  %138 = vmatpush1.msra.mxu0 0.0
  %139 = vmatprep.subr.mxu0 0.0
  %140 = vmatpush1.msra.mxu0 0.0
  %141 = vmatprep.subr.mxu0 0.0
  %142 = vmatpush1.msra.mxu0 0.0
  %143 = vmatprep.subr.mxu0 0.0
  %144 = vmatpush1.msra.mxu0 0.0
  %145 = vmatprep.subr.mxu0 0.0
  %146 = vmatpush1.msra.mxu0 0.0
  %147 = vmatprep.subr.mxu0 0.0
  %148 = vmatpush1.msra.mxu0 0.0
  %149 = vmatprep.subr.mxu0 0.0
  %150 = vmatpush1.msra.mxu0 0.0
  %151 = vmatprep.subr.mxu0 0.0
  %152 = vmatpush1.msra.mxu0 0.0
  %153 = vmatprep.subr.mxu0 0.0
  %154 = vmatpush1.msra.mxu0 0.0
  %155 = vmatprep.subr.mxu0 0.0
  %156 = vmatpush1.msra.mxu0 0.0
  %157 = vmatprep.subr.mxu0 0.0
  %158 = vmatpush1.msra.mxu0 0.0
  %159 = vmatprep.subr.mxu0 0.0
  %160 = vmatpush1.msra.mxu0 0.0
  %161 = vmatprep.subr.mxu0 0.0
  %162 = vmatpush1.msra.mxu0 0.0
  %163 = vmatprep.subr.mxu0 0.0
  %164 = vmatpush1.msra.mxu0 0.0
  %165 = vmatprep.subr.mxu0 0.0
  %166 = vmatpush1.msra.mxu0 0.0
  %167 = vmatprep.subr.mxu0 0.0
  %168 = vmatpush1.msra.mxu0 %v135
  %169 = vmatprep.subr.mxu0 0.0
  %170 = vmatpush2.msra.mxu0 0.0
  %171 = vmatprep.subr.mxu0 0.0
  %172 = vmatpush2.msra.mxu0 0.0
  %173 = vmatprep.subr.mxu0 0.0
  %174 = vmatpush2.msra.mxu0 0.0
  %175 = vmatprep.subr.mxu0 0.0
  %176 = vmatpush2.msra.mxu0 0.0
  %177 = vmatprep.subr.mxu0 0.0
  %178 = vmatpush2.msra.mxu0 0.0
  %179 = vmatprep.subr.mxu0 0.0
  %180 = vmatpush2.msra.mxu0 0.0
  %181 = vmatprep.subr.mxu0 0.0
  %182 = vmatpush2.msra.mxu0 0.0
  %183 = vmatprep.subr.mxu0 0.0
  %184 = vmatpush2.msra.mxu0 0.0
  %185 = vmatprep.subr.mxu0 0.0
  %186 = vmatpush2.msra.mxu0 0.0
  %187 = vmatprep.subr.mxu0 0.0
  %188 = vmatpush2.msra.mxu0 0.0
  %189 = vmatprep.subr.mxu0 0.0
  %190 = vmatpush2.msra.mxu0 0.0
  %191 = vmatprep.subr.mxu0 0.0
  %192 = vmatpush2.msra.mxu0 0.0
  %193 = vmatprep.subr.mxu0 0.0
  %194 = vmatpush2.msra.mxu0 0.0
  %195 = vmatprep.subr.mxu0 0.0
  %196 = vmatpush2.msra.mxu0 0.0
  %197 = vmatprep.subr.mxu0 0.0
  %198 = vmatpush2.msra.mxu0 0.0
  %199 = vmatprep.subr.mxu0 0.0
  %200 = vmatpush2.msra.mxu0 0.0
  %201 = vmatprep.mubr.f32.mxu0 0.0
  %202 = vmatmul.mubr.f32.gmra.mxu0 %v130
  %v203 = vpop.f32.mrf.mxu0
  %v204 = vadd.f32 %v121, %v203
  %v205 = vpop.f32.mrf.mxu0
  %206 = vmatprep.mubr.f32.mxu0 0.0
  %207 = vmatmul.mubr.f32.gmra.mxu0 %v133
  %v208 = vpop.f32.mrf.mxu0
  %v209 = vadd.f32 %v126, %v208
  %v210 = vpop.f32.mrf.mxu0
  %211 = vdwg.mxu0
  %s212 = scalar_lea.vmem %s1, 32
  %v213 = vld [vmem:[%s212] sm:$0xff]
  %v214 = vld [vmem:[%s212 + $0x8] sm:$0xff]
  %v216 = vsel %vm43, %v213, 0
  %v219 = vsel %vm43, %v214, 0
  %v222 = vsel %vm50, %v37, 0
  %224 = vmatprep.subr.mxu0 0.0
  %225 = vmatpush1.msra.mxu0 0.0
  %226 = vmatprep.subr.mxu0 0.0
  %227 = vmatpush1.msra.mxu0 0.0
  %228 = vmatprep.subr.mxu0 0.0
  %229 = vmatpush1.msra.mxu0 0.0
  %230 = vmatprep.subr.mxu0 0.0
  %231 = vmatpush1.msra.mxu0 0.0
  %232 = vmatprep.subr.mxu0 0.0
  %233 = vmatpush1.msra.mxu0 0.0
  %234 = vmatprep.subr.mxu0 0.0
  %235 = vmatpush1.msra.mxu0 0.0
  %236 = vmatprep.subr.mxu0 0.0
  %237 = vmatpush1.msra.mxu0 0.0
  %238 = vmatprep.subr.mxu0 0.0
  %239 = vmatpush1.msra.mxu0 0.0
  %240 = vmatprep.subr.mxu0 0.0
  %241 = vmatpush1.msra.mxu0 0.0
  %242 = vmatprep.subr.mxu0 0.0
  %243 = vmatpush1.msra.mxu0 0.0
  %244 = vmatprep.subr.mxu0 0.0
  %245 = vmatpush1.msra.mxu0 0.0
  %246 = vmatprep.subr.mxu0 0.0
  %247 = vmatpush1.msra.mxu0 0.0
  %248 = vmatprep.subr.mxu0 0.0
  %249 = vmatpush1.msra.mxu0 0.0
  %250 = vmatprep.subr.mxu0 0.0
  %251 = vmatpush1.msra.mxu0 0.0
  %252 = vmatprep.subr.mxu0 0.0
  %253 = vmatpush1.msra.mxu0 0.0
  %254 = vmatprep.subr.mxu0 0.0
  %255 = vmatpush1.msra.mxu0 %v222
  %256 = vmatprep.subr.mxu0 0.0
  %257 = vmatpush2.msra.mxu0 0.0
  %258 = vmatprep.subr.mxu0 0.0
  %259 = vmatpush2.msra.mxu0 0.0
  %260 = vmatprep.subr.mxu0 0.0
  %261 = vmatpush2.msra.mxu0 0.0
  %262 = vmatprep.subr.mxu0 0.0
  %263 = vmatpush2.msra.mxu0 0.0
  %264 = vmatprep.subr.mxu0 0.0
  %265 = vmatpush2.msra.mxu0 0.0
  %266 = vmatprep.subr.mxu0 0.0
  %267 = vmatpush2.msra.mxu0 0.0
  %268 = vmatprep.subr.mxu0 0.0
  %269 = vmatpush2.msra.mxu0 0.0
  %270 = vmatprep.subr.mxu0 0.0
  %271 = vmatpush2.msra.mxu0 0.0
  %272 = vmatprep.subr.mxu0 0.0
  %273 = vmatpush2.msra.mxu0 0.0
  %274 = vmatprep.subr.mxu0 0.0
  %275 = vmatpush2.msra.mxu0 0.0
  %276 = vmatprep.subr.mxu0 0.0
  %277 = vmatpush2.msra.mxu0 0.0
  %278 = vmatprep.subr.mxu0 0.0
  %279 = vmatpush2.msra.mxu0 0.0
  %280 = vmatprep.subr.mxu0 0.0
  %281 = vmatpush2.msra.mxu0 0.0
  %282 = vmatprep.subr.mxu0 0.0
  %283 = vmatpush2.msra.mxu0 0.0
  %284 = vmatprep.subr.mxu0 0.0
  %285 = vmatpush2.msra.mxu0 0.0
  %286 = vmatprep.subr.mxu0 0.0
  %287 = vmatpush2.msra.mxu0 0.0
  %288 = vmatprep.mubr.f32.mxu0 0.0
  %289 = vmatmul.mubr.f32.gmra.mxu0 %v216
  %v290 = vpop.f32.mrf.mxu0
  %v291 = vadd.f32 0.0, %v290
  %v292 = vpop.f32.mrf.mxu0
  %293 = vmatprep.mubr.f32.mxu0 0.0
  %294 = vmatmul.mubr.f32.gmra.mxu0 %v219
  %v295 = vpop.f32.mrf.mxu0
  %v296 = vadd.f32 0.0, %v295
  %v297 = vpop.f32.mrf.mxu0
  %298 = vdwg.mxu0
  %v299 = vadd.f32 %v204, %v291
  %v300 = vadd.f32 %v209, %v296
  %v301 = vld [vmem:[%s2] sm:$0xff]
  %v302 = vld [vmem:[%s2 + $0x8] sm:$0xff]
  %304 = vset.pattern.permute.xlu0 0
  %305 = vperm.xlu0 %304, %v301
  %v306 = vpop.permute.xlu0 %305
  %309 = vset.pattern.permute.xlu0 0
  %310 = vperm.xlu0 %309, %v302
  %v311 = vpop.permute.xlu0 %310
  %v313 = vadd.f32 %v299, %v306
  %v314 = vadd.f32 %v300, %v311
  %v315 = vmax.f32 %v313, 0.0
  %v316 = vmax.f32 %v314, 0.0
  %v317 = vld [vmem:[%s3] sm:$0xff]
  %v318 = vld [vmem:[%s4] sm:$0xff]
  %320 = vset.pattern.permute.xlu0 0
  %321 = vperm.xlu0 %320, %v318
  %v322 = vpop.permute.xlu0 %321
  %vm324 = vcmask 130048
  %v326 = vsel %vm324, %v317, 0
  %328 = vmatprep.subr.mxu0 0.0
  %329 = vmatpush1.msra.mxu0 0.0
  %330 = vmatprep.subr.mxu0 0.0
  %331 = vmatpush1.msra.mxu0 0.0
  %332 = vmatprep.subr.mxu0 0.0
  %333 = vmatpush1.msra.mxu0 0.0
  %334 = vmatprep.subr.mxu0 0.0
  %335 = vmatpush1.msra.mxu0 0.0
  %336 = vmatprep.subr.mxu0 0.0
  %337 = vmatpush1.msra.mxu0 0.0
  %338 = vmatprep.subr.mxu0 0.0
  %339 = vmatpush1.msra.mxu0 0.0
  %340 = vmatprep.subr.mxu0 0.0
  %341 = vmatpush1.msra.mxu0 0.0
  %342 = vmatprep.subr.mxu0 0.0
  %343 = vmatpush1.msra.mxu0 0.0
  %344 = vmatprep.subr.mxu0 0.0
  %345 = vmatpush1.msra.mxu0 0.0
  %346 = vmatprep.subr.mxu0 0.0
  %347 = vmatpush1.msra.mxu0 0.0
  %348 = vmatprep.subr.mxu0 0.0
  %349 = vmatpush1.msra.mxu0 0.0
  %350 = vmatprep.subr.mxu0 0.0
  %351 = vmatpush1.msra.mxu0 0.0
  %352 = vmatprep.subr.mxu0 0.0
  %353 = vmatpush1.msra.mxu0 0.0
  %354 = vmatprep.subr.mxu0 0.0
  %355 = vmatpush1.msra.mxu0 0.0
  %356 = vmatprep.subr.mxu0 0.0
  %357 = vmatpush1.msra.mxu0 %v316
  %358 = vmatprep.subr.mxu0 0.0
  %359 = vmatpush1.msra.mxu0 %v315
  %360 = vmatprep.subr.mxu0 0.0
  %361 = vmatpush2.msra.mxu0 0.0
  %362 = vmatprep.subr.mxu0 0.0
  %363 = vmatpush2.msra.mxu0 0.0
  %364 = vmatprep.subr.mxu0 0.0
  %365 = vmatpush2.msra.mxu0 0.0
  %366 = vmatprep.subr.mxu0 0.0
  %367 = vmatpush2.msra.mxu0 0.0
  %368 = vmatprep.subr.mxu0 0.0
  %369 = vmatpush2.msra.mxu0 0.0
  %370 = vmatprep.subr.mxu0 0.0
  %371 = vmatpush2.msra.mxu0 0.0
  %372 = vmatprep.subr.mxu0 0.0
  %373 = vmatpush2.msra.mxu0 0.0
  %374 = vmatprep.subr.mxu0 0.0
  %375 = vmatpush2.msra.mxu0 0.0
  %376 = vmatprep.subr.mxu0 0.0
  %377 = vmatpush2.msra.mxu0 0.0
  %378 = vmatprep.subr.mxu0 0.0
  %379 = vmatpush2.msra.mxu0 0.0
  %380 = vmatprep.subr.mxu0 0.0
  %381 = vmatpush2.msra.mxu0 0.0
  %382 = vmatprep.subr.mxu0 0.0
  %383 = vmatpush2.msra.mxu0 0.0
  %384 = vmatprep.subr.mxu0 0.0
  %385 = vmatpush2.msra.mxu0 0.0
  %386 = vmatprep.subr.mxu0 0.0
  %387 = vmatpush2.msra.mxu0 0.0
  %388 = vmatprep.subr.mxu0 0.0
  %389 = vmatpush2.msra.mxu0 0.0
  %390 = vmatprep.subr.mxu0 0.0
  %391 = vmatpush2.msra.mxu0 0.0
  %392 = vmatprep.mubr.f32.mxu0 0.0
  %393 = vmatmul.mubr.f32.gmra.mxu0 %v326
  %v394 = vpop.f32.mrf.mxu0
  %v395 = vadd.f32 %v322, %v394
  %v396 = vpop.f32.mrf.mxu0
  %397 = vdwg.mxu0
  %v398 = vmax.f32 %v395, 0.0
  %vm399 = vcmask 261120
  %400 = vst.msk [vmem:[%s5] sm:$0xff] %vm399, %v398
  // Predicated region
  $region22: #{the_model_forward.1} parent=0 // pred_check
    _
  $region23: #{the_model_forward.1} parent=0 // pred_check_branch
    %402 = sbr.rel (0) target = $region25
  $region24: #{the_model_forward.1} parent=0 // pred_region
    _
  $region25: #{the_model_forward.1} parent=0 // pred_fallthru
    _
  // Predicated region
  $region26: #{the_model_forward.1} parent=0 // pred_check
    _
  $region27: #{the_model_forward.1} parent=0 // pred_check_branch
    %404 = sbr.rel (0) target = $region29
  $region28: #{the_model_forward.1} parent=0 // pred_region
    _
  $region29: #{the_model_forward.1} parent=0 // pred_fallthru
    _

</llo_original>
